<compile_context>
chip_gen: v7x
topology: tpu7x:2x2x1
jax: 0.10.0
libtpu: 0.0.40
codegen_flags: <defaults>
</compile_context>

<pallas_src>
import functools

import jax
import jax.numpy as jnp
import numpy as np
from jax import lax
from jax.experimental import pallas as pl
from jax.experimental.pallas import tpu as pltpu


def _round_up(x, m):
    return ((x + m - 1) // m) * m


def _emb_df_kernel(x_ref, seg_ref, segt_ref, wgt_ref, btot_ref, o_ref,
                   *, num_samples, eps):
    """One batch tile (transposed layout).

    x_ref   : (K, Bt)  f32/bf16  column b = flattened (k = s*F + f) input of example b
    seg_ref : (K, F)   f32       seg[k, f]  = 1 if k % F == f  (broadcast-back)
    segt_ref: (F, K)   f32       segT[f, k] = 1 if k % F == f  (per-feature sums)
    wgt_ref : (D, K)   bf16      fused weight^T (LayerNorm gamma folded in)
    btot_ref: (D, 1)   f32       fused bias (beta / b1-through-W2 / b2 folded in)
    o_ref   : (D, Bt)  f32       out^T
    """
    x = x_ref[...].astype(jnp.float32)                                   # (K, Bt)
    seg = seg_ref[...]
    segt = segt_ref[...]
    inv_s = 1.0 / num_samples

    # Per-(feature, batch) LayerNorm statistics via tiny lane-dense matmuls
    # (N = Bt); no in-kernel reshape/transpose needed.  Two-pass (centered)
    # variance for numerical robustness.
    mu = jnp.dot(segt, x, preferred_element_type=jnp.float32) * inv_s    # (F, Bt)
    mu_b = jnp.dot(seg, mu, preferred_element_type=jnp.float32)          # (K, Bt)
    xc = x - mu_b
    var = jnp.dot(segt, xc * xc, preferred_element_type=jnp.float32) * inv_s  # (F, Bt)
    inv_std = lax.rsqrt(var + eps)
    inv_b = jnp.dot(seg, inv_std, preferred_element_type=jnp.float32)    # (K, Bt)
    z = xc * inv_b            # affine-free LayerNorm (gamma/beta folded into wgt/btot)

    # Fused Linear1 -> flatten -> Linear2, transposed: (D, K) @ (K, Bt).
    ao = jnp.dot(wgt_ref[...], z.astype(wgt_ref.dtype),
                 preferred_element_type=jnp.float32) + btot_ref[...]     # (D, Bt)
    ao = jnp.where(jnp.isnan(ao), jnp.zeros_like(ao), ao)  # torch.where(isnan, 0, .)
    o_ref[...] = ao.astype(o_ref.dtype)


def fuse_emb_df_params(w1, b1, w2, b2, gamma, beta, *, weight_dtype=jnp.bfloat16):
    """One-time fusion (amortized across calls) of LayerNorm affine + both Linears.

    w1: (D, S)  b1: (D,)  w2: (D, F*D)  b2: (D,)  gamma/beta: (S,)
    Flattening order is k = s*F + f (so x.reshape(B, S*F) needs no swapaxes).
    Returns wgT: (D, K) in `weight_dtype`, btot: (D, 1) f32 such that
        Emb_df(x)^T == where(isnan(wgT @ z + btot), 0, .)
    where z is the flattened, affine-less LayerNorm of the input.
    """
    w1 = jnp.asarray(w1, jnp.float32)
    b1 = jnp.asarray(b1, jnp.float32)
    w2 = jnp.asarray(w2, jnp.float32)
    b2 = jnp.asarray(b2, jnp.float32)
    gamma = jnp.asarray(gamma, jnp.float32)
    beta = jnp.asarray(beta, jnp.float32)

    D, S = w1.shape
    assert w2.shape[0] == D and w2.shape[1] % D == 0
    F = w2.shape[1] // D

    w2r = w2.reshape(D, F, D)                        # w2r[e, f, d] = W2[e, f*D + d]
    # Weff[s*F + f, e] = sum_d W1[d, s] * W2[e, f*D + d]
    weff = jnp.einsum("ds,efd->sfe", w1, w2r).reshape(S * F, D)   # (K, D)
    # Bias: b2 + (b1 routed through Linear2) + (beta routed through Weff).
    b1_through = jnp.einsum("d,efd->e", b1, w2r)
    gamma_k = jnp.repeat(gamma, F)                   # value gamma[s] at k = s*F + f
    beta_k = jnp.repeat(beta, F)
    beta_through = beta_k @ weff
    btot = (b2 + b1_through + beta_through).reshape(D, 1).astype(jnp.float32)
    # Fold gamma into the weight, transpose, then cast (halves the weight DMA).
    wgt = (gamma_k[:, None] * weff).T.astype(weight_dtype)        # (D, K)
    return wgt, btot


def make_segment_mats(num_samples, num_features, dtype=jnp.float32):
    """Precomputed segment-indicator matrices for k = s*F + f flattening."""
    K = num_samples * num_features
    k = np.arange(K)
    f = np.arange(num_features)
    seg = (k[:, None] % num_features == f[None, :]).astype(np.float32)   # (K, F)
    return jnp.asarray(seg, dtype), jnp.asarray(seg.T, dtype)            # (K,F),(F,K)


def _choose_batch_tile(B, block_b):
    """Lane-axis (batch) tile: multiple of 128; keep >= 2 grid steps when B > 128."""
    block_b = max(128, (block_b // 128) * 128)
    if B <= 128:
        bt = 128
    else:
        half = _round_up((B + 1) // 2, 128)   # ceil(B/2) rounded up to 128
        bt = min(block_b, half)
    b_pad = _round_up(B, bt)
    return bt, b_pad


def emb_df_forward_batched(x_batch, wgt, btot, seg, segt, *, eps=1e-5,
                           block_b=512, input_dtype=jnp.float32):
    """B independent Emb_df forwards in one pallas_call.

    x_batch: (B, S, F) f32 -- B stacked `input_c.values` arrays.  Returns (B, D) f32.
    """
    x_batch = jnp.asarray(x_batch, jnp.float32)
    B, S, F = x_batch.shape
    D, K = wgt.shape
    assert K == S * F, (K, S, F)

    # k = s*F + f flattening: plain reshape; transpose to (K, B) so the batch
    # sits on the lane/N axis (lane-dense output slab).  Wrapper-side layout
    # plumbing only.  Optionally DMA activations as bf16.
    x_t = x_batch.reshape(B, K).T.astype(input_dtype)                    # (K, B)

    bt, b_pad = _choose_batch_tile(B, block_b)
    if b_pad != B:
        x_t = jnp.pad(x_t, ((0, 0), (0, b_pad - B)))

    out_t = pl.pallas_call(
        functools.partial(_emb_df_kernel, num_samples=S, eps=eps),
        out_shape=jax.ShapeDtypeStruct((D, b_pad), jnp.float32),
        grid=(b_pad // bt,),
        in_specs=[
            pl.BlockSpec((K, bt), lambda i: (0, i)),   # activations (batch on lanes)
            pl.BlockSpec((K, F), lambda i: (0, 0)),    # VMEM-resident constants
            pl.BlockSpec((F, K), lambda i: (0, 0)),
            pl.BlockSpec((D, K), lambda i: (0, 0)),
            pl.BlockSpec((D, 1), lambda i: (0, 0)),
        ],
        out_specs=pl.BlockSpec((D, bt), lambda i: (0, i)),
        compiler_params=pltpu.CompilerParams(
            dimension_semantics=("parallel",)),        # shards steps across TCs on v7x
    )(x_t, seg, segt, wgt, btot)

    return out_t[:, :B].T                                                # (B, D)


def emb_df_forward(x_vals, wgt, btot, seg, segt, *, eps=1e-5):
    """Module-exact single call: x_vals (S, F) -> (1, D), like Emb_df.forward."""
    # TODO(synk): the pandas `torch.from_numpy(input_c.values)` conversion is
    # host-side I/O with no Pallas equivalent; this takes the numeric array directly.
    return emb_df_forward_batched(x_vals[None], wgt, btot, seg, segt, eps=eps)


def _emb_df_reference(x_vals, w1, b1, w2, b2, gamma, beta, eps=1e-5):
    """Plain-JAX f32 mirror of the PyTorch Emb_df forward."""
    x = jnp.asarray(x_vals, jnp.float32).T                 # (F, S)
    mu = x.mean(axis=-1, keepdims=True)
    var = jnp.mean((x - mu) ** 2, axis=-1, keepdims=True)
    ln = (x - mu) / jnp.sqrt(var + eps) * gamma + beta
    out = ln @ w1.T + b1                                   # (F, D)
    out1 = out.reshape(1, -1)                              # (1, F*D)
    ao = out1 @ w2.T + b2                                  # (1, D)
    return jnp.where(jnp.isnan(ao), 0.0, ao)


if __name__ == "__main__":
    num_samples = 16     # S
    num_features = 8     # F
    d_model = 32         # D   (K = F*S = 128)

    key = jax.random.PRNGKey(0)
    kx, kxb, kxc, kw1, kb1, kw2, kb2, kg, kbt = jax.random.split(key, 9)

    # PyTorch-Linear-like deterministic init; non-trivial LayerNorm affine to
    # exercise the gamma/beta folding.
    lim1 = 1.0 / np.sqrt(num_samples)
    w1 = jax.random.uniform(kw1, (d_model, num_samples), jnp.float32, -lim1, lim1)
    b1 = jax.random.uniform(kb1, (d_model,), jnp.float32, -lim1, lim1)
    lim2 = 1.0 / np.sqrt(num_features * d_model)
    w2 = jax.random.uniform(kw2, (d_model, num_features * d_model),
                            jnp.float32, -lim2, lim2)
    b2 = jax.random.uniform(kb2, (d_model,), jnp.float32, -lim2, lim2)
    gamma = 1.0 + 0.1 * jax.random.normal(kg, (num_samples,), jnp.float32)
    beta = 0.05 * jax.random.normal(kbt, (num_samples,), jnp.float32)

    # One-time fused parameters + segment constants, reused across calls.
    wgt, btot = fuse_emb_df_params(w1, b1, w2, b2, gamma, beta)
    seg, segt = make_segment_mats(num_samples, num_features)

    # bf16 fused weights (and optionally bf16 activations) with f32 accumulation.
    rtol = atol = 2e-2

    # 1) Module-exact path: one (num_samples, num_features) input -> (1, D).
    x_single = jax.random.normal(kx, (num_samples, num_features), jnp.float32)
    out1 = jax.block_until_ready(emb_df_forward(x_single, wgt, btot, seg, segt))
    ref1 = _emb_df_reference(x_single, w1, b1, w2, b2, gamma, beta)
    assert out1.shape == (1, d_model)
    np.testing.assert_allclose(np.asarray(out1), np.asarray(ref1), rtol=rtol, atol=atol)

    # 2) Small batch, f32 activations (single grid step, lane-dense output).
    B = 16
    x_batch = jax.random.normal(kxb, (B, num_samples, num_features), jnp.float32)
    outb = jax.block_until_ready(
        emb_df_forward_batched(x_batch, wgt, btot, seg, segt))
    refb = jax.vmap(
        lambda xv: _emb_df_reference(xv, w1, b1, w2, b2, gamma, beta)[0])(x_batch)
    assert outb.shape == (B, d_model)
    np.testing.assert_allclose(np.asarray(outb), np.asarray(refb), rtol=rtol, atol=atol)

    # 3) Larger batch with bf16 activation DMA: grid = 2 parallel steps
    #    (megacore-shardable on v7x), 128-lane batch tiles.
    B2 = 256
    x_big = jax.random.normal(kxc, (B2, num_samples, num_features), jnp.float32)
    outc = jax.block_until_ready(
        emb_df_forward_batched(x_big, wgt, btot, seg, segt,
                               input_dtype=jnp.bfloat16))
    refc = jax.vmap(
        lambda xv: _emb_df_reference(xv, w1, b1, w2, b2, gamma, beta)[0])(x_big)
    assert outc.shape == (B2, d_model)
    np.testing.assert_allclose(np.asarray(outc), np.asarray(refc), rtol=rtol, atol=atol)

    print("KERNEL_OK")
</pallas_src>

<mosaic_0001>
module attributes {stable_mosaic.version = 11 : i64} {
  func.func @_emb_df_kernel(%arg0: i32, %arg1: memref<128x128xf32, #tpu.memory_space<vmem>>, %arg2: memref<128x8xf32, #tpu.memory_space<vmem>>, %arg3: memref<8x128xf32, #tpu.memory_space<vmem>>, %arg4: memref<32x128xbf16, #tpu.memory_space<vmem>>, %arg5: memref<32x1xf32, #tpu.memory_space<vmem>>, %arg6: memref<32x128xf32, #tpu.memory_space<vmem>>) attributes {dimension_semantics = [#tpu.dimension_semantics<parallel>], iteration_bounds = array<i64: 1>, scalar_prefetch = 0 : i64, scratch_operands = 0 : i64, tpu.core_type = #tpu.core_type<tc>, window_params = [{transform_indices = @transform_0, window_bounds = array<i64: 128, 128>}, {pipeline_mode = #tpu.pipeline_mode<synchronous>, transform_indices = @transform_1, window_bounds = array<i64: 128, 8>}, {pipeline_mode = #tpu.pipeline_mode<synchronous>, transform_indices = @transform_2, window_bounds = array<i64: 8, 128>}, {pipeline_mode = #tpu.pipeline_mode<synchronous>, transform_indices = @transform_3, window_bounds = array<i64: 32, 128>}, {pipeline_mode = #tpu.pipeline_mode<synchronous>, transform_indices = @transform_4, window_bounds = array<i64: 32, 1>}, {transform_indices = @transform_5, window_bounds = array<i64: 32, 128>}]} {
    %c0 = arith.constant 0 : index
    %c0_0 = arith.constant 0 : index
    %0 = vector.load %arg1[%c0, %c0_0] : memref<128x128xf32, #tpu.memory_space<vmem>>, vector<128x128xf32>
    %c0_1 = arith.constant 0 : index
    %c0_2 = arith.constant 0 : index
    %1 = vector.load %arg2[%c0_1, %c0_2] : memref<128x8xf32, #tpu.memory_space<vmem>>, vector<128x8xf32>
    %c0_3 = arith.constant 0 : index
    %c0_4 = arith.constant 0 : index
    %2 = vector.load %arg3[%c0_3, %c0_4] : memref<8x128xf32, #tpu.memory_space<vmem>>, vector<8x128xf32>
    %cst = arith.constant dense<0.000000e+00> : vector<8x128xf32>
    %3 = tpu.matmul %2, %0, %cst {dimension_numbers = #tpu.dot_dimension_numbers<[1], [0], [0], [1], [0, 0, 1, 1], [], []>} : vector<8x128xf32>, vector<128x128xf32>, vector<8x128xf32> -> vector<8x128xf32>
    %cst_5 = arith.constant 6.250000e-02 : f32
    %4 = vector.broadcast %cst_5 : f32 to vector<8x128xf32>
    %5 = arith.mulf %3, %4 : vector<8x128xf32>
    %cst_6 = arith.constant dense<0.000000e+00> : vector<128x128xf32>
    %6 = tpu.matmul %1, %5, %cst_6 {dimension_numbers = #tpu.dot_dimension_numbers<[1], [0], [0], [1], [0, 0, 1, 1], [], []>} : vector<128x8xf32>, vector<8x128xf32>, vector<128x128xf32> -> vector<128x128xf32>
    %7 = arith.subf %0, %6 : vector<128x128xf32>
    %8 = arith.mulf %7, %7 : vector<128x128xf32>
    %cst_7 = arith.constant dense<0.000000e+00> : vector<8x128xf32>
    %9 = tpu.matmul %2, %8, %cst_7 {dimension_numbers = #tpu.dot_dimension_numbers<[1], [0], [0], [1], [0, 0, 1, 1], [], []>} : vector<8x128xf32>, vector<128x128xf32>, vector<8x128xf32> -> vector<8x128xf32>
    %cst_8 = arith.constant 6.250000e-02 : f32
    %10 = vector.broadcast %cst_8 : f32 to vector<8x128xf32>
    %11 = arith.mulf %9, %10 : vector<8x128xf32>
    %cst_9 = arith.constant 9.99999974E-6 : f32
    %12 = vector.broadcast %cst_9 : f32 to vector<8x128xf32>
    %13 = arith.addf %11, %12 : vector<8x128xf32>
    %14 = math.rsqrt %13 : vector<8x128xf32>
    %cst_10 = arith.constant dense<0.000000e+00> : vector<128x128xf32>
    %15 = tpu.matmul %1, %14, %cst_10 {dimension_numbers = #tpu.dot_dimension_numbers<[1], [0], [0], [1], [0, 0, 1, 1], [], []>} : vector<128x8xf32>, vector<8x128xf32>, vector<128x128xf32> -> vector<128x128xf32>
    %16 = arith.mulf %7, %15 : vector<128x128xf32>
    %c0_11 = arith.constant 0 : index
    %c0_12 = arith.constant 0 : index
    %17 = vector.load %arg4[%c0_11, %c0_12] : memref<32x128xbf16, #tpu.memory_space<vmem>>, vector<32x128xbf16>
    %18 = arith.truncf %16 : vector<128x128xf32> to vector<128x128xbf16>
    %cst_13 = arith.constant dense<0.000000e+00> : vector<32x128xf32>
    %19 = tpu.matmul %17, %18, %cst_13 {dimension_numbers = #tpu.dot_dimension_numbers<[1], [0], [0], [1], [0, 0, 1, 1], [], []>} : vector<32x128xbf16>, vector<128x128xbf16>, vector<32x128xf32> -> vector<32x128xf32>
    %c0_14 = arith.constant 0 : index
    %c0_15 = arith.constant 0 : index
    %20 = vector.load %arg5[%c0_14, %c0_15] : memref<32x1xf32, #tpu.memory_space<vmem>>, vector<32x1xf32>
    %21 = vector.broadcast %20 : vector<32x1xf32> to vector<32x128xf32>
    %22 = arith.addf %19, %21 : vector<32x128xf32>
    %23 = arith.cmpf one, %22, %22 : vector<32x128xf32>
    %cst_16 = arith.constant 0.000000e+00 : f32
    %24 = vector.broadcast %cst_16 : f32 to vector<32x128xf32>
    %25 = arith.select %23, %24, %22 : vector<32x128xi1>, vector<32x128xf32>
    %c0_17 = arith.constant 0 : index
    %c0_18 = arith.constant 0 : index
    %26 = vector.load %arg6[%c0_17, %c0_18] : memref<32x128xf32, #tpu.memory_space<vmem>>, vector<32x128xf32>
    tpu.vector_store %arg6[%c0_17, %c0_18], %25 {strides = array<i32>} : memref<32x128xf32, #tpu.memory_space<vmem>>, vector<32x128xf32>,
    return
  }
  func.func @transform_0(%arg0: i32) -> (i32, i32) {
    %c0_i32 = arith.constant 0 : i32
    %c0_i32_0 = arith.constant 0 : i32
    return %c0_i32, %arg0 : i32, i32
  }
  func.func @transform_1(%arg0: i32) -> (i32, i32) {
    %c0_i32 = arith.constant 0 : i32
    %c0_i32_0 = arith.constant 0 : i32
    %c0_i32_1 = arith.constant 0 : i32
    return %c0_i32, %c0_i32_0 : i32, i32
  }
  func.func @transform_2(%arg0: i32) -> (i32, i32) {
    %c0_i32 = arith.constant 0 : i32
    %c0_i32_0 = arith.constant 0 : i32
    %c0_i32_1 = arith.constant 0 : i32
    return %c0_i32, %c0_i32_0 : i32, i32
  }
  func.func @transform_3(%arg0: i32) -> (i32, i32) {
    %c0_i32 = arith.constant 0 : i32
    %c0_i32_0 = arith.constant 0 : i32
    %c0_i32_1 = arith.constant 0 : i32
    return %c0_i32, %c0_i32_0 : i32, i32
  }
  func.func @transform_4(%arg0: i32) -> (i32, i32) {
    %c0_i32 = arith.constant 0 : i32
    %c0_i32_0 = arith.constant 0 : i32
    %c0_i32_1 = arith.constant 0 : i32
    return %c0_i32, %c0_i32_0 : i32, i32
  }
  func.func @transform_5(%arg0: i32) -> (i32, i32) {
    %c0_i32 = arith.constant 0 : i32
    %c0_i32_0 = arith.constant 0 : i32
    return %c0_i32, %arg0 : i32, i32
  }
}

</mosaic_0001>

<llo_original>
// kernel: tpu_custom_call.1
$region0: #{tpu_custom_call.1}
  #allocation0 [shape = 'u32[]', space=smem, size = 0x4, offset = 0x4, fixed_abs, tag = 'smem constant byte address 0x4 - core index']
  #allocation1 [shape = 'u32[144,128]{1,0:T(1,128)}', space=vmem, size = 0x12000, scoped, tag = 'internal scratch']
  %s0 = inlined_call_operand.vmem [shape: f32[128,128], index: 0, kind: input, shape index: {}]
  %s1 = inlined_call_operand.vmem [shape: f32[128,8], index: 1, kind: input, shape index: {}]
  %s2 = inlined_call_operand.vmem [shape: f32[8,128], index: 2, kind: input, shape index: {}]
  %s3 = inlined_call_operand.vmem [shape: bf16[32,128], index: 3, kind: input, shape index: {}]
  %s4 = inlined_call_operand.vmem [shape: f32[32,1], index: 4, kind: input, shape index: {}]
  %s5 = inlined_call_operand.hbm [shape: f32[32,128], index: 5, kind: output, shape index: {}]
  %s6 = sld [smem:[#allocation0]]
  $region30: #{tpu_custom_call.1} parent=0
    _
  %s8 = ssub.s32 1, %s6
  %s9 = scalar_select 0, %s8, %s6
  $region1: #{tpu_custom_call.1} parent=0
    #allocation2 [shape = 'u8[16384]{0}', space=vmem, size = 0x4000, scoped, tag = 'output window, operand 0, single buffered']
    #allocation3 [shape = 's32[1]{0}', space=sflag, size = 0x4, scoped, tag = 'scoped memory for tpu_custom_call.1']
    %10 = vsyncpa [#allocation3], 0
    // Predicated region
    $region2: #{tpu_custom_call.1} parent=1 // pred_check
      _
    $region3: #{tpu_custom_call.1} parent=1 // pred_check_branch
      %12 = sbr.rel (0) target = $region5
    $region4: #{tpu_custom_call.1} parent=1 // pred_region
      _
    $region5: #{tpu_custom_call.1} parent=1 // pred_fallthru
      _
    // Predicated region
    $region6: #{tpu_custom_call.1} parent=1 // pred_check
      _
    $region7: #{tpu_custom_call.1} parent=1 // pred_check_branch
      %14 = sbr.rel (0) target = $region9
    $region8: #{tpu_custom_call.1} parent=1 // pred_region
      _
    $region9: #{tpu_custom_call.1} parent=1 // pred_fallthru
      _
    // Predicated region
    $region10: #{tpu_custom_call.1} parent=1 // pred_check
      _
    $region11: #{tpu_custom_call.1} parent=1 // pred_check_branch
      %16 = sbr.rel (0) target = $region13
    $region12: #{tpu_custom_call.1} parent=1 // pred_region
      _
    $region13: #{tpu_custom_call.1} parent=1 // pred_fallthru
      _
    // Predicated region
    $region14: #{tpu_custom_call.1} parent=1 // pred_check
      _
    $region15: #{tpu_custom_call.1} parent=1 // pred_check_branch
      %18 = sbr.rel (0) target = $region17
    $region16: #{tpu_custom_call.1} parent=1 // pred_region
      _
    $region17: #{tpu_custom_call.1} parent=1 // pred_fallthru
      _
    // Predicated region
    $region18: #{tpu_custom_call.1} parent=1 // pred_check
      _
    $region19: #{tpu_custom_call.1} parent=1 // pred_check_branch
      %20 = sbr.rel (0) target = $region21
    $region20: #{tpu_custom_call.1} parent=1 // pred_region
      _
    $region21: #{tpu_custom_call.1} parent=1 // pred_fallthru
      _
    %v22 = vld [vmem:[%s0] sm:$0xff]
    %v23 = vld [vmem:[%s0 + $0x8] sm:$0xff]
    %v24 = vld [vmem:[%s0 + $0x10] sm:$0xff]
    %v25 = vld [vmem:[%s0 + $0x18] sm:$0xff]
    %v26 = vld [vmem:[%s0 + $0x20] sm:$0xff]
    %v27 = vld [vmem:[%s0 + $0x28] sm:$0xff]
    %v28 = vld [vmem:[%s0 + $0x30] sm:$0xff]
    %v29 = vld [vmem:[%s0 + $0x38] sm:$0xff]
    %v30 = vld [vmem:[%s0 + $0x40] sm:$0xff]
    %v31 = vld [vmem:[%s0 + $0x48] sm:$0xff]
    %v32 = vld [vmem:[%s0 + $0x50] sm:$0xff]
    %v33 = vld [vmem:[%s0 + $0x58] sm:$0xff]
    %v34 = vld [vmem:[%s0 + $0x60] sm:$0xff]
    %v35 = vld [vmem:[%s0 + $0x68] sm:$0xff]
    %v36 = vld [vmem:[%s0 + $0x70] sm:$0xff]
    %v37 = vld [vmem:[%s0 + $0x78] sm:$0xff]
    %v38 = vld [vmem:[%s1] sm:$0xff]
    %v39 = vld [vmem:[%s1 + $0x8] sm:$0xff]
    %v40 = vld [vmem:[%s1 + $0x10] sm:$0xff]
    %v41 = vld [vmem:[%s1 + $0x18] sm:$0xff]
    %v42 = vld [vmem:[%s1 + $0x20] sm:$0xff]
    %v43 = vld [vmem:[%s1 + $0x28] sm:$0xff]
    %v44 = vld [vmem:[%s1 + $0x30] sm:$0xff]
    %v45 = vld [vmem:[%s1 + $0x38] sm:$0xff]
    %v46 = vld [vmem:[%s1 + $0x40] sm:$0xff]
    %v47 = vld [vmem:[%s1 + $0x48] sm:$0xff]
    %v48 = vld [vmem:[%s1 + $0x50] sm:$0xff]
    %v49 = vld [vmem:[%s1 + $0x58] sm:$0xff]
    %v50 = vld [vmem:[%s1 + $0x60] sm:$0xff]
    %v51 = vld [vmem:[%s1 + $0x68] sm:$0xff]
    %v52 = vld [vmem:[%s1 + $0x70] sm:$0xff]
    %v53 = vld [vmem:[%s1 + $0x78] sm:$0xff]
    %v54 = vld [vmem:[%s2] sm:$0xff]
    %55 = vmatprep.subr.mxu0 0.0
    %56 = vmatpush1.msra.mxu0 %v22
    %57 = vmatprep.subr.mxu0 0.0
    %58 = vmatpush1.msra.mxu0 %v23
    %59 = vmatprep.subr.mxu0 0.0
    %60 = vmatpush1.msra.mxu0 %v24
    %61 = vmatprep.subr.mxu0 0.0
    %62 = vmatpush1.msra.mxu0 %v25
    %63 = vmatprep.subr.mxu0 0.0
    %64 = vmatpush1.msra.mxu0 %v26
    %65 = vmatprep.subr.mxu0 0.0
    %66 = vmatpush1.msra.mxu0 %v27
    %67 = vmatprep.subr.mxu0 0.0
    %68 = vmatpush1.msra.mxu0 %v28
    %69 = vmatprep.subr.mxu0 0.0
    %70 = vmatpush1.msra.mxu0 %v29
    %71 = vmatprep.subr.mxu0 0.0
    %72 = vmatpush1.msra.mxu0 %v30
    %73 = vmatprep.subr.mxu0 0.0
    %74 = vmatpush1.msra.mxu0 %v31
    %75 = vmatprep.subr.mxu0 0.0
    %76 = vmatpush1.msra.mxu0 %v32
    %77 = vmatprep.subr.mxu0 0.0
    %78 = vmatpush1.msra.mxu0 %v33
    %79 = vmatprep.subr.mxu0 0.0
    %80 = vmatpush1.msra.mxu0 %v34
    %81 = vmatprep.subr.mxu0 0.0
    %82 = vmatpush1.msra.mxu0 %v35
    %83 = vmatprep.subr.mxu0 0.0
    %84 = vmatpush1.msra.mxu0 %v36
    %85 = vmatprep.subr.mxu0 0.0
    %86 = vmatpush1.msra.mxu0 %v37
    %87 = vmatprep.subr.mxu0 0.0
    %88 = vmatpush1.msra.mxu0 0.0
    %89 = vmatprep.subr.mxu0 0.0
    %90 = vmatpush1.msra.mxu0 0.0
    %91 = vmatprep.subr.mxu0 0.0
    %92 = vmatpush1.msra.mxu0 0.0
    %93 = vmatprep.subr.mxu0 0.0
    %94 = vmatpush1.msra.mxu0 0.0
    %95 = vmatprep.subr.mxu0 0.0
    %96 = vmatpush1.msra.mxu0 0.0
    %97 = vmatprep.subr.mxu0 0.0
    %98 = vmatpush1.msra.mxu0 0.0
    %99 = vmatprep.subr.mxu0 0.0
    %100 = vmatpush1.msra.mxu0 0.0
    %101 = vmatprep.subr.mxu0 0.0
    %102 = vmatpush1.msra.mxu0 0.0
    %103 = vmatprep.subr.mxu0 0.0
    %104 = vmatpush1.msra.mxu0 0.0
    %105 = vmatprep.subr.mxu0 0.0
    %106 = vmatpush1.msra.mxu0 0.0
    %107 = vmatprep.subr.mxu0 0.0
    %108 = vmatpush1.msra.mxu0 0.0
    %109 = vmatprep.subr.mxu0 0.0
    %110 = vmatpush1.msra.mxu0 0.0
    %111 = vmatprep.subr.mxu0 0.0
    %112 = vmatpush1.msra.mxu0 0.0
    %113 = vmatprep.subr.mxu0 0.0
    %114 = vmatpush1.msra.mxu0 0.0
    %115 = vmatprep.subr.mxu0 0.0
    %116 = vmatpush1.msra.mxu0 0.0
    %117 = vmatprep.subr.mxu0 0.0
    %118 = vmatpush1.msra.mxu0 0.0
    %119 = vmatprep.mubr.f32.mxu0 0.0
    %120 = vmatmul.mubr.f32.gmra.mrb[0].mxu0 %v54
    %v121 = vpop.f32.mrb[0].mxu0
    %v122 = vadd.f32 0.0, %v121
    %v123 = vpop.f32.mrb[0].mxu0
    %124 = vdwg.mxu0
    %v125 = vmul.f32 %v122, 0.0625
    %vm126 = vcmask 64512
    %v128 = vsel %vm126, %v38, 0
    %v131 = vsel %vm126, %v39, 0
    %v134 = vsel %vm126, %v40, 0
    %v137 = vsel %vm126, %v41, 0
    %v140 = vsel %vm126, %v42, 0
    %v143 = vsel %vm126, %v43, 0
    %v146 = vsel %vm126, %v44, 0
    %v149 = vsel %vm126, %v45, 0
    %v152 = vsel %vm126, %v46, 0
    %v155 = vsel %vm126, %v47, 0
    %v158 = vsel %vm126, %v48, 0
    %v161 = vsel %vm126, %v49, 0
    %v164 = vsel %vm126, %v50, 0
    %v167 = vsel %vm126, %v51, 0
    %v170 = vsel %vm126, %v52, 0
    %v173 = vsel %vm126, %v53, 0
    %175 = vmatprep.subr.mxu0 0.0
    %176 = vmatpush1.msra.mxu0 %v125
    %177 = vmatprep.subr.mxu0 0.0
    %178 = vmatpush1.msra.mxu0 0.0
    %179 = vmatprep.subr.mxu0 0.0
    %180 = vmatpush1.msra.mxu0 0.0
    %181 = vmatprep.subr.mxu0 0.0
    %182 = vmatpush1.msra.mxu0 0.0
    %183 = vmatprep.subr.mxu0 0.0
    %184 = vmatpush1.msra.mxu0 0.0
    %185 = vmatprep.subr.mxu0 0.0
    %186 = vmatpush1.msra.mxu0 0.0
    %187 = vmatprep.subr.mxu0 0.0
    %188 = vmatpush1.msra.mxu0 0.0
    %189 = vmatprep.subr.mxu0 0.0
    %190 = vmatpush1.msra.mxu0 0.0
    %191 = vmatprep.subr.mxu0 0.0
    %192 = vmatpush1.msra.mxu0 0.0
    %193 = vmatprep.subr.mxu0 0.0
    %194 = vmatpush1.msra.mxu0 0.0
    %195 = vmatprep.subr.mxu0 0.0
    %196 = vmatpush1.msra.mxu0 0.0
    %197 = vmatprep.subr.mxu0 0.0
    %198 = vmatpush1.msra.mxu0 0.0
    %199 = vmatprep.subr.mxu0 0.0
    %200 = vmatpush1.msra.mxu0 0.0
    %201 = vmatprep.subr.mxu0 0.0
    %202 = vmatpush1.msra.mxu0 0.0
    %203 = vmatprep.subr.mxu0 0.0
    %204 = vmatpush1.msra.mxu0 0.0
    %205 = vmatprep.subr.mxu0 0.0
    %206 = vmatpush1.msra.mxu0 0.0
    %207 = vmatprep.subr.mxu0 0.0
    %208 = vmatpush1.msra.mxu0 0.0
    %209 = vmatprep.subr.mxu0 0.0
    %210 = vmatpush1.msra.mxu0 0.0
    %211 = vmatprep.subr.mxu0 0.0
    %212 = vmatpush1.msra.mxu0 0.0
    %213 = vmatprep.subr.mxu0 0.0
    %214 = vmatpush1.msra.mxu0 0.0
    %215 = vmatprep.subr.mxu0 0.0
    %216 = vmatpush1.msra.mxu0 0.0
    %217 = vmatprep.subr.mxu0 0.0
    %218 = vmatpush1.msra.mxu0 0.0
    %219 = vmatprep.subr.mxu0 0.0
    %220 = vmatpush1.msra.mxu0 0.0
    %221 = vmatprep.subr.mxu0 0.0
    %222 = vmatpush1.msra.mxu0 0.0
    %223 = vmatprep.subr.mxu0 0.0
    %224 = vmatpush1.msra.mxu0 0.0
    %225 = vmatprep.subr.mxu0 0.0
    %226 = vmatpush1.msra.mxu0 0.0
    %227 = vmatprep.subr.mxu0 0.0
    %228 = vmatpush1.msra.mxu0 0.0
    %229 = vmatprep.subr.mxu0 0.0
    %230 = vmatpush1.msra.mxu0 0.0
    %231 = vmatprep.subr.mxu0 0.0
    %232 = vmatpush1.msra.mxu0 0.0
    %233 = vmatprep.subr.mxu0 0.0
    %234 = vmatpush1.msra.mxu0 0.0
    %235 = vmatprep.subr.mxu0 0.0
    %236 = vmatpush1.msra.mxu0 0.0
    %237 = vmatprep.subr.mxu0 0.0
    %238 = vmatpush1.msra.mxu0 0.0
    %239 = vmatprep.mubr.f32.mxu0 0.0
    %240 = vmatmul.mubr.f32.gmra.mrb[0].mxu0 %v128
    %v241 = vpop.f32.mrb[0].mxu0
    %v242 = vadd.f32 0.0, %v241
    %v243 = vpop.f32.mrb[0].mxu0
    %244 = vmatprep.mubr.f32.mxu0 0.0
    %245 = vmatmul.mubr.f32.gmra.mrb[0].mxu0 %v131
    %v246 = vpop.f32.mrb[0].mxu0
    %v247 = vadd.f32 0.0, %v246
    %v248 = vpop.f32.mrb[0].mxu0
    %249 = vmatprep.mubr.f32.mxu0 0.0
    %250 = vmatmul.mubr.f32.gmra.mrb[0].mxu0 %v134
    %v251 = vpop.f32.mrb[0].mxu0
    %v252 = vadd.f32 0.0, %v251
    %v253 = vpop.f32.mrb[0].mxu0
    %254 = vmatprep.mubr.f32.mxu0 0.0
    %255 = vmatmul.mubr.f32.gmra.mrb[0].mxu0 %v137
    %v256 = vpop.f32.mrb[0].mxu0
    %v257 = vadd.f32 0.0, %v256
    %v258 = vpop.f32.mrb[0].mxu0
    %259 = vmatprep.mubr.f32.mxu0 0.0
    %260 = vmatmul.mubr.f32.gmra.mrb[0].mxu0 %v140
    %v261 = vpop.f32.mrb[0].mxu0
    %v262 = vadd.f32 0.0, %v261
    %v263 = vpop.f32.mrb[0].mxu0
    %264 = vmatprep.mubr.f32.mxu0 0.0
    %265 = vmatmul.mubr.f32.gmra.mrb[0].mxu0 %v143
    %v266 = vpop.f32.mrb[0].mxu0
    %v267 = vadd.f32 0.0, %v266
    %v268 = vpop.f32.mrb[0].mxu0
    %269 = vmatprep.mubr.f32.mxu0 0.0
    %270 = vmatmul.mubr.f32.gmra.mrb[0].mxu0 %v146
    %v271 = vpop.f32.mrb[0].mxu0
    %v272 = vadd.f32 0.0, %v271
    %v273 = vpop.f32.mrb[0].mxu0
    %274 = vmatprep.mubr.f32.mxu0 0.0
    %275 = vmatmul.mubr.f32.gmra.mrb[0].mxu0 %v149
    %v276 = vpop.f32.mrb[0].mxu0
    %v277 = vadd.f32 0.0, %v276
    %v278 = vpop.f32.mrb[0].mxu0
    %279 = vmatprep.mubr.f32.mxu0 0.0
    %280 = vmatmul.mubr.f32.gmra.mrb[0].mxu0 %v152
    %v281 = vpop.f32.mrb[0].mxu0
    %v282 = vadd.f32 0.0, %v281
    %v283 = vpop.f32.mrb[0].mxu0
    %284 = vmatprep.mubr.f32.mxu0 0.0
    %285 = vmatmul.mubr.f32.gmra.mrb[0].mxu0 %v155
    %v286 = vpop.f32.mrb[0].mxu0
    %v287 = vadd.f32 0.0, %v286
    %v288 = vpop.f32.mrb[0].mxu0
    %289 = vmatprep.mubr.f32.mxu0 0.0
    %290 = vmatmul.mubr.f32.gmra.mrb[0].mxu0 %v158
    %v291 = vpop.f32.mrb[0].mxu0
    %v292 = vadd.f32 0.0, %v291
    %v293 = vpop.f32.mrb[0].mxu0
    %294 = vmatprep.mubr.f32.mxu0 0.0
    %295 = vmatmul.mubr.f32.gmra.mrb[0].mxu0 %v161
    %v296 = vpop.f32.mrb[0].mxu0
    %v297 = vadd.f32 0.0, %v296
    %v298 = vpop.f32.mrb[0].mxu0
    %299 = vmatprep.mubr.f32.mxu0 0.0
    %300 = vmatmul.mubr.f32.gmra.mrb[0].mxu0 %v164
    %v301 = vpop.f32.mrb[0].mxu0
    %v302 = vadd.f32 0.0, %v301
    %v303 = vpop.f32.mrb[0].mxu0
    %304 = vmatprep.mubr.f32.mxu0 0.0
    %305 = vmatmul.mubr.f32.gmra.mrb[0].mxu0 %v167
    %v306 = vpop.f32.mrb[0].mxu0
    %v307 = vadd.f32 0.0, %v306
    %v308 = vpop.f32.mrb[0].mxu0
    %309 = vmatprep.mubr.f32.mxu0 0.0
    %310 = vmatmul.mubr.f32.gmra.mrb[0].mxu0 %v170
    %v311 = vpop.f32.mrb[0].mxu0
    %v312 = vadd.f32 0.0, %v311
    %v313 = vpop.f32.mrb[0].mxu0
    %314 = vmatprep.mubr.f32.mxu0 0.0
    %315 = vmatmul.mubr.f32.gmra.mrb[0].mxu0 %v173
    %v316 = vpop.f32.mrb[0].mxu0
    %v317 = vadd.f32 0.0, %v316
    %v318 = vpop.f32.mrb[0].mxu0
    %319 = vdwg.mxu0
    %v320 = vsub.f32 %v22, %v242
    %v321 = vsub.f32 %v23, %v247
    %v322 = vsub.f32 %v24, %v252
    %v323 = vsub.f32 %v25, %v257
    %v324 = vsub.f32 %v26, %v262
    %v325 = vsub.f32 %v27, %v267
    %v326 = vsub.f32 %v28, %v272
    %v327 = vsub.f32 %v29, %v277
    %v328 = vsub.f32 %v30, %v282
    %v329 = vsub.f32 %v31, %v287
    %v330 = vsub.f32 %v32, %v292
    %v331 = vsub.f32 %v33, %v297
    %v332 = vsub.f32 %v34, %v302
    %v333 = vsub.f32 %v35, %v307
    %v334 = vsub.f32 %v36, %v312
    %v335 = vsub.f32 %v37, %v317
    %v336 = vmul.f32 %v320, %v320
    %v337 = vmul.f32 %v321, %v321
    %v338 = vmul.f32 %v322, %v322
    %v339 = vmul.f32 %v323, %v323
    %v340 = vmul.f32 %v324, %v324
    %v341 = vmul.f32 %v325, %v325
    %v342 = vmul.f32 %v326, %v326
    %v343 = vmul.f32 %v327, %v327
    %v344 = vmul.f32 %v328, %v328
    %v345 = vmul.f32 %v329, %v329
    %v346 = vmul.f32 %v330, %v330
    %v347 = vmul.f32 %v331, %v331
    %v348 = vmul.f32 %v332, %v332
    %v349 = vmul.f32 %v333, %v333
    %v350 = vmul.f32 %v334, %v334
    %v351 = vmul.f32 %v335, %v335
    %352 = vmatprep.subr.mxu0 0.0
    %353 = vmatpush1.msra.mxu0 %v336
    %354 = vmatprep.subr.mxu0 0.0
    %355 = vmatpush1.msra.mxu0 %v337
    %356 = vmatprep.subr.mxu0 0.0
    %357 = vmatpush1.msra.mxu0 %v338
    %358 = vmatprep.subr.mxu0 0.0
    %359 = vmatpush1.msra.mxu0 %v339
    %360 = vmatprep.subr.mxu0 0.0
    %361 = vmatpush1.msra.mxu0 %v340
    %362 = vmatprep.subr.mxu0 0.0
    %363 = vmatpush1.msra.mxu0 %v341
    %364 = vmatprep.subr.mxu0 0.0
    %365 = vmatpush1.msra.mxu0 %v342
    %366 = vmatprep.subr.mxu0 0.0
    %367 = vmatpush1.msra.mxu0 %v343
    %368 = vmatprep.subr.mxu0 0.0
    %369 = vmatpush1.msra.mxu0 %v344
    %370 = vmatprep.subr.mxu0 0.0
    %371 = vmatpush1.msra.mxu0 %v345
    %372 = vmatprep.subr.mxu0 0.0
    %373 = vmatpush1.msra.mxu0 %v346
    %374 = vmatprep.subr.mxu0 0.0
    %375 = vmatpush1.msra.mxu0 %v347
    %376 = vmatprep.subr.mxu0 0.0
    %377 = vmatpush1.msra.mxu0 %v348
    %378 = vmatprep.subr.mxu0 0.0
    %379 = vmatpush1.msra.mxu0 %v349
    %380 = vmatprep.subr.mxu0 0.0
    %381 = vmatpush1.msra.mxu0 %v350
    %382 = vmatprep.subr.mxu0 0.0
    %383 = vmatpush1.msra.mxu0 %v351
    %384 = vmatprep.subr.mxu0 0.0
    %385 = vmatpush1.msra.mxu0 0.0
    %386 = vmatprep.subr.mxu0 0.0
    %387 = vmatpush1.msra.mxu0 0.0
    %388 = vmatprep.subr.mxu0 0.0
    %389 = vmatpush1.msra.mxu0 0.0
    %390 = vmatprep.subr.mxu0 0.0
    %391 = vmatpush1.msra.mxu0 0.0
    %392 = vmatprep.subr.mxu0 0.0
    %393 = vmatpush1.msra.mxu0 0.0
    %394 = vmatprep.subr.mxu0 0.0
    %395 = vmatpush1.msra.mxu0 0.0
    %396 = vmatprep.subr.mxu0 0.0
    %397 = vmatpush1.msra.mxu0 0.0
    %398 = vmatprep.subr.mxu0 0.0
    %399 = vmatpush1.msra.mxu0 0.0
    %400 = vmatprep.subr.mxu0 0.0
    %401 = vmatpush1.msra.mxu0 0.0
    %402 = vmatprep.subr.mxu0 0.0
    %403 = vmatpush1.msra.mxu0 0.0
    %404 = vmatprep.subr.mxu0 0.0
    %405 = vmatpush1.msra.mxu0 0.0
    %406 = vmatprep.subr.mxu0 0.0
    %407 = vmatpush1.msra.mxu0 0.0
    %408 = vmatprep.subr.mxu0 0.0
    %409 = vmatpush1.msra.mxu0 0.0
    %410 = vmatprep.subr.mxu0 0.0
    %411 = vmatpush1.msra.mxu0 0.0
    %412 = vmatprep.subr.mxu0 0.0
    %413 = vmatpush1.msra.mxu0 0.0
    %414 = vmatprep.subr.mxu0 0.0
    %415 = vmatpush1.msra.mxu0 0.0
    %416 = vmatprep.mubr.f32.mxu0 0.0
    %417 = vmatmul.mubr.f32.gmra.mrb[0].mxu0 %v54
    %v418 = vpop.f32.mrb[0].mxu0
    %v419 = vadd.f32 0.0, %v418
    %v420 = vpop.f32.mrb[0].mxu0
    %421 = vdwg.mxu0
    %v422 = vmul.f32 %v419, 0.0625
    %v423 = vadd.f32 %v422, 1e-05
    %v424 = vrsqrt.pop %v423
    %425 = vmatprep.subr.mxu0 0.0
    %426 = vmatpush1.msra.mxu0 %v424
    %427 = vmatprep.subr.mxu0 0.0
    %428 = vmatpush1.msra.mxu0 0.0
    %429 = vmatprep.subr.mxu0 0.0
    %430 = vmatpush1.msra.mxu0 0.0
    %431 = vmatprep.subr.mxu0 0.0
    %432 = vmatpush1.msra.mxu0 0.0
    %433 = vmatprep.subr.mxu0 0.0
    %434 = vmatpush1.msra.mxu0 0.0
    %435 = vmatprep.subr.mxu0 0.0
    %436 = vmatpush1.msra.mxu0 0.0
    %437 = vmatprep.subr.mxu0 0.0
    %438 = vmatpush1.msra.mxu0 0.0
    %439 = vmatprep.subr.mxu0 0.0
    %440 = vmatpush1.msra.mxu0 0.0
    %441 = vmatprep.subr.mxu0 0.0
    %442 = vmatpush1.msra.mxu0 0.0
    %443 = vmatprep.subr.mxu0 0.0
    %444 = vmatpush1.msra.mxu0 0.0
    %445 = vmatprep.subr.mxu0 0.0
    %446 = vmatpush1.msra.mxu0 0.0
    %447 = vmatprep.subr.mxu0 0.0
    %448 = vmatpush1.msra.mxu0 0.0
    %449 = vmatprep.subr.mxu0 0.0
    %450 = vmatpush1.msra.mxu0 0.0
    %451 = vmatprep.subr.mxu0 0.0
    %452 = vmatpush1.msra.mxu0 0.0
    %453 = vmatprep.subr.mxu0 0.0
    %454 = vmatpush1.msra.mxu0 0.0
    %455 = vmatprep.subr.mxu0 0.0
    %456 = vmatpush1.msra.mxu0 0.0
    %457 = vmatprep.subr.mxu0 0.0
    %458 = vmatpush1.msra.mxu0 0.0
    %459 = vmatprep.subr.mxu0 0.0
    %460 = vmatpush1.msra.mxu0 0.0
    %461 = vmatprep.subr.mxu0 0.0
    %462 = vmatpush1.msra.mxu0 0.0
    %463 = vmatprep.subr.mxu0 0.0
    %464 = vmatpush1.msra.mxu0 0.0
    %465 = vmatprep.subr.mxu0 0.0
    %466 = vmatpush1.msra.mxu0 0.0
    %467 = vmatprep.subr.mxu0 0.0
    %468 = vmatpush1.msra.mxu0 0.0
    %469 = vmatprep.subr.mxu0 0.0
    %470 = vmatpush1.msra.mxu0 0.0
    %471 = vmatprep.subr.mxu0 0.0
    %472 = vmatpush1.msra.mxu0 0.0
    %473 = vmatprep.subr.mxu0 0.0
    %474 = vmatpush1.msra.mxu0 0.0
    %475 = vmatprep.subr.mxu0 0.0
    %476 = vmatpush1.msra.mxu0 0.0
    %477 = vmatprep.subr.mxu0 0.0
    %478 = vmatpush1.msra.mxu0 0.0
    %479 = vmatprep.subr.mxu0 0.0
    %480 = vmatpush1.msra.mxu0 0.0
    %481 = vmatprep.subr.mxu0 0.0
    %482 = vmatpush1.msra.mxu0 0.0
    %483 = vmatprep.subr.mxu0 0.0
    %484 = vmatpush1.msra.mxu0 0.0
    %485 = vmatprep.subr.mxu0 0.0
    %486 = vmatpush1.msra.mxu0 0.0
    %487 = vmatprep.subr.mxu0 0.0
    %488 = vmatpush1.msra.mxu0 0.0
    %489 = vmatprep.mubr.f32.mxu0 0.0
    %490 = vmatmul.mubr.f32.gmra.mrb[0].mxu0 %v128
    %v491 = vpop.f32.mrb[0].mxu0
    %v492 = vadd.f32 0.0, %v491
    %v493 = vpop.f32.mrb[0].mxu0
    %494 = vmatprep.mubr.f32.mxu0 0.0
    %495 = vmatmul.mubr.f32.gmra.mrb[0].mxu0 %v131
    %v496 = vpop.f32.mrb[0].mxu0
    %v497 = vadd.f32 0.0, %v496
    %v498 = vpop.f32.mrb[0].mxu0
    %499 = vmatprep.mubr.f32.mxu0 0.0
    %500 = vmatmul.mubr.f32.gmra.mrb[0].mxu0 %v134
    %v501 = vpop.f32.mrb[0].mxu0
    %v502 = vadd.f32 0.0, %v501
    %v503 = vpop.f32.mrb[0].mxu0
    %504 = vmatprep.mubr.f32.mxu0 0.0
    %505 = vmatmul.mubr.f32.gmra.mrb[0].mxu0 %v137
    %v506 = vpop.f32.mrb[0].mxu0
    %v507 = vadd.f32 0.0, %v506
    %v508 = vpop.f32.mrb[0].mxu0
    %509 = vmatprep.mubr.f32.mxu0 0.0
    %510 = vmatmul.mubr.f32.gmra.mrb[0].mxu0 %v140
    %v511 = vpop.f32.mrb[0].mxu0
    %v512 = vadd.f32 0.0, %v511
    %v513 = vpop.f32.mrb[0].mxu0
    %514 = vmatprep.mubr.f32.mxu0 0.0
    %515 = vmatmul.mubr.f32.gmra.mrb[0].mxu0 %v143
    %v516 = vpop.f32.mrb[0].mxu0
    %v517 = vadd.f32 0.0, %v516
    %v518 = vpop.f32.mrb[0].mxu0
    %519 = vmatprep.mubr.f32.mxu0 0.0
    %520 = vmatmul.mubr.f32.gmra.mrb[0].mxu0 %v146
    %v521 = vpop.f32.mrb[0].mxu0
    %v522 = vadd.f32 0.0, %v521
    %v523 = vpop.f32.mrb[0].mxu0
    %524 = vmatprep.mubr.f32.mxu0 0.0
    %525 = vmatmul.mubr.f32.gmra.mrb[0].mxu0 %v149
    %v526 = vpop.f32.mrb[0].mxu0
    %v527 = vadd.f32 0.0, %v526
    %v528 = vpop.f32.mrb[0].mxu0
    %529 = vmatprep.mubr.f32.mxu0 0.0
    %530 = vmatmul.mubr.f32.gmra.mrb[0].mxu0 %v152
    %v531 = vpop.f32.mrb[0].mxu0
    %v532 = vadd.f32 0.0, %v531
    %v533 = vpop.f32.mrb[0].mxu0
    %534 = vmatprep.mubr.f32.mxu0 0.0
    %535 = vmatmul.mubr.f32.gmra.mrb[0].mxu0 %v155
    %v536 = vpop.f32.mrb[0].mxu0
    %v537 = vadd.f32 0.0, %v536
    %v538 = vpop.f32.mrb[0].mxu0
    %539 = vmatprep.mubr.f32.mxu0 0.0
    %540 = vmatmul.mubr.f32.gmra.mrb[0].mxu0 %v158
    %v541 = vpop.f32.mrb[0].mxu0
    %v542 = vadd.f32 0.0, %v541
    %v543 = vpop.f32.mrb[0].mxu0
    %544 = vmatprep.mubr.f32.mxu0 0.0
    %545 = vmatmul.mubr.f32.gmra.mrb[0].mxu0 %v161
    %v546 = vpop.f32.mrb[0].mxu0
    %v547 = vadd.f32 0.0, %v546
    %v548 = vpop.f32.mrb[0].mxu0
    %549 = vmatprep.mubr.f32.mxu0 0.0
    %550 = vmatmul.mubr.f32.gmra.mrb[0].mxu0 %v164
    %v551 = vpop.f32.mrb[0].mxu0
    %v552 = vadd.f32 0.0, %v551
    %v553 = vpop.f32.mrb[0].mxu0
    %554 = vmatprep.mubr.f32.mxu0 0.0
    %555 = vmatmul.mubr.f32.gmra.mrb[0].mxu0 %v167
    %v556 = vpop.f32.mrb[0].mxu0
    %v557 = vadd.f32 0.0, %v556
    %v558 = vpop.f32.mrb[0].mxu0
    %559 = vmatprep.mubr.f32.mxu0 0.0
    %560 = vmatmul.mubr.f32.gmra.mrb[0].mxu0 %v170
    %v561 = vpop.f32.mrb[0].mxu0
    %v562 = vadd.f32 0.0, %v561
    %v563 = vpop.f32.mrb[0].mxu0
    %564 = vmatprep.mubr.f32.mxu0 0.0
    %565 = vmatmul.mubr.f32.gmra.mrb[0].mxu0 %v173
    %v566 = vpop.f32.mrb[0].mxu0
    %v567 = vadd.f32 0.0, %v566
    %v568 = vpop.f32.mrb[0].mxu0
    %569 = vdwg.mxu0
    %v570 = vmul.f32 %v320, %v492
    %v571 = vmul.f32 %v321, %v497
    %v572 = vmul.f32 %v322, %v502
    %v573 = vmul.f32 %v323, %v507
    %v574 = vmul.f32 %v324, %v512
    %v575 = vmul.f32 %v325, %v517
    %v576 = vmul.f32 %v326, %v522
    %v577 = vmul.f32 %v327, %v527
    %v578 = vmul.f32 %v328, %v532
    %v579 = vmul.f32 %v329, %v537
    %v580 = vmul.f32 %v330, %v542
    %v581 = vmul.f32 %v331, %v547
    %v582 = vmul.f32 %v332, %v552
    %v583 = vmul.f32 %v333, %v557
    %v584 = vmul.f32 %v334, %v562
    %v585 = vmul.f32 %v335, %v567
    %v586 = vld [vmem:[%s3] sm:$0xf]
    %v587 = vld [vmem:[%s3 + $0x4] sm:$0xf]
    %v588 = vld [vmem:[%s3 + $0x8] sm:$0xf]
    %v589 = vld [vmem:[%s3 + $0xc] sm:$0xf]
    %v590 = vpack.c.bf16 %v571, %v570
    %v591 = vpack.c.bf16 %v573, %v572
    %v592 = vpack.c.bf16 %v575, %v574
    %v593 = vpack.c.bf16 %v577, %v576
    %v594 = vpack.c.bf16 %v579, %v578
    %v595 = vpack.c.bf16 %v581, %v580
    %v596 = vpack.c.bf16 %v583, %v582
    %v597 = vpack.c.bf16 %v585, %v584
    %v598 = vld [vmem:[%s4] sm:$0xff]
    %v599 = vld [vmem:[%s4 + $0x8] sm:$0xff]
    %v600 = vld [vmem:[%s4 + $0x10] sm:$0xff]
    %v601 = vld [vmem:[%s4 + $0x18] sm:$0xff]
    %603 = vset.pattern.permute.xlu0 0
    %604 = vperm.xlu0 %603, %v598
    %v605 = vpop.permute.xlu0 %604
    %608 = vset.pattern.permute.xlu0 0
    %609 = vperm.xlu0 %608, %v599
    %v610 = vpop.permute.xlu0 %609
    %613 = vset.pattern.permute.xlu0 0
    %614 = vperm.xlu0 %613, %v600
    %v615 = vpop.permute.xlu0 %614
    %618 = vset.pattern.permute.xlu0 0
    %619 = vperm.xlu0 %618, %v601
    %v620 = vpop.permute.xlu0 %619
    %v626 = vunpack.c.l.b16 %v586
    %v627 = vunpack.c.l.b16 %v587
    %v628 = vunpack.c.l.b16 %v588
    %v629 = vunpack.c.l.b16 %v589
    %v630 = vpack.c.b16 %v627, %v626
    %v631 = vpack.c.b16 %v629, %v628
    %634 = vmatprep.subr.bf16.mxu0 0
    %635 = vmatpush1.bf16.msra.mxu0 %v590
    %636 = vmatprep.subr.bf16.mxu0 0
    %637 = vmatpush1.bf16.msra.mxu0 %v591
    %638 = vmatprep.subr.bf16.mxu0 0
    %639 = vmatpush1.bf16.msra.mxu0 %v592
    %640 = vmatprep.subr.bf16.mxu0 0
    %641 = vmatpush1.bf16.msra.mxu0 %v593
    %642 = vmatprep.subr.bf16.mxu0 0
    %643 = vmatpush1.bf16.msra.mxu0 %v594
    %644 = vmatprep.subr.bf16.mxu0 0
    %645 = vmatpush1.bf16.msra.mxu0 %v595
    %646 = vmatprep.subr.bf16.mxu0 0
    %647 = vmatpush1.bf16.msra.mxu0 %v596
    %648 = vmatprep.subr.bf16.mxu0 0
    %649 = vmatpush1.bf16.msra.mxu0 %v597
    %650 = vmatprep.subr.bf16.mxu0 0
    %651 = vmatpush1.bf16.msra.mxu0 0
    %652 = vmatprep.subr.bf16.mxu0 0
    %653 = vmatpush1.bf16.msra.mxu0 0
    %654 = vmatprep.subr.bf16.mxu0 0
    %655 = vmatpush1.bf16.msra.mxu0 0
    %656 = vmatprep.subr.bf16.mxu0 0
    %657 = vmatpush1.bf16.msra.mxu0 0
    %658 = vmatprep.subr.bf16.mxu0 0
    %659 = vmatpush1.bf16.msra.mxu0 0
    %660 = vmatprep.subr.bf16.mxu0 0
    %661 = vmatpush1.bf16.msra.mxu0 0
    %662 = vmatprep.subr.bf16.mxu0 0
    %663 = vmatpush1.bf16.msra.mxu0 0
    %664 = vmatprep.subr.bf16.mxu0 0
    %665 = vmatpush1.bf16.msra.mxu0 0
    %666 = vmatprep.mubr.bf16.mxu0 0
    %667 = vmatmul.mubr.bf16.gmra.mrb[0].mxu0 %v630
    %v668 = vpop.f32.mrb[0].mxu0
    %v669 = vadd.f32 %v605, %v668
    %v670 = vpop.f32.mrb[0].mxu0
    %v671 = vpop.f32.mrb[0].mxu0
    %v672 = vadd.f32 %v610, %v671
    %v673 = vpop.f32.mrb[0].mxu0
    %674 = vmatprep.mubr.bf16.mxu0 0
    %675 = vmatmul.mubr.bf16.gmra.mrb[0].mxu0 %v631
    %v676 = vpop.f32.mrb[0].mxu0
    %v677 = vadd.f32 %v615, %v676
    %v678 = vpop.f32.mrb[0].mxu0
    %v679 = vpop.f32.mrb[0].mxu0
    %v680 = vadd.f32 %v620, %v679
    %v681 = vpop.f32.mrb[0].mxu0
    %682 = vdwg.mxu0
    %vm683 = vcmp.ne.f32.partialorder %v669, %v669
    %vm684 = vcmp.ne.f32.partialorder %v672, %v672
    %vm685 = vcmp.ne.f32.partialorder %v677, %v677
    %vm686 = vcmp.ne.f32.partialorder %v680, %v680
    %v687 = vsel %vm683, 0.0, %v669
    %v688 = vsel %vm684, 0.0, %v672
    %v689 = vsel %vm685, 0.0, %v677
    %v690 = vsel %vm686, 0.0, %v680
    %691 = vst [vmem:[#allocation2] sm:$0xff] %v687
    %692 = vst [vmem:[#allocation2 + $0x8] sm:$0xff] %v688
    %693 = vst [vmem:[#allocation2 + $0x10] sm:$0xff] %v689
    %694 = vst [vmem:[#allocation2 + $0x18] sm:$0xff] %v690
    // Predicated region
    $region22: #{tpu_custom_call.1} parent=1 // pred_check
      _
    $region23: #{tpu_custom_call.1} parent=1 // pred_check_branch
      %696 = sbr.rel (0) target = $region25
    $region24: #{tpu_custom_call.1} parent=1 // pred_region
      %s698 = ssub.s32 512, 512
      %699 = vsyncadd [#allocation3], %s698
      %s700 = sshll.u32 [#allocation2], 4
      %s701 = int_to_ptr.vmem [resolvable:$true] %s700
      %706 = dma.vmem_to_hbm [thread:$0]  %s701, 512, %s5, [#allocation3], 128, 128, 8
    $region25: #{tpu_custom_call.1} parent=1 // pred_fallthru
      _
    // Predicated region
    $region26: #{tpu_custom_call.1} parent=1 // pred_check
      _
    $region27: #{tpu_custom_call.1} parent=1 // pred_check_branch
      %708 = sbr.rel (0) target = $region29
    $region28: #{tpu_custom_call.1} parent=1 // pred_region
      %709 = dma.done [#allocation3], 512
    $region29: #{tpu_custom_call.1} parent=1 // pred_fallthru
      _
    %710 = vsyncpa [#allocation3], 1

</llo_original>
